<compile_context>
chip_gen: v5e
topology: v5e:2x2
jax: 0.10.0
libtpu: 0.0.40
codegen_flags: <defaults>
</compile_context>

<pallas_src>
import math

import jax
import jax.numpy as jnp
from jax.experimental import pallas as pl
from jax.experimental.pallas import tpu as pltpu

FREQ_EMB_SIZE = 256          # frequency_embedding_size
HIDDEN_SIZE = 32             # hidden_size (small, for the demo)
MAX_PERIOD = 10000.0
DEFAULT_TILE_N = 256         # timestep rows per grid step (f32)


def _round_up(x, m):
    return ((x + m - 1) // m) * m


def _timestep_embedder_kernel(t_ref, freqs_ref, w1_ref, b1_ref, w2_ref, b2_ref,
                              out_ref):
    # t_ref:     (TILE_N, 1)    f32  timestep tile (streamed over the grid)
    # freqs_ref: (1, half)      f32  grid-invariant, VMEM-resident
    # w1_ref:    (2*half, H)    f32  grid-invariant, VMEM-resident
    # b1_ref:    (1, H)         f32
    # w2_ref:    (H, H)         f32
    # b2_ref:    (1, H)         f32
    # out_ref:   (TILE_N, H)    f32
    t = t_ref[...]                        # (TILE_N, 1)
    freqs = freqs_ref[...]                # (1, half)
    args = t * freqs                      # (TILE_N, half) broadcast outer product

    # Sinusoidal embedding. cos/sin are adjacent 128-lane column groups, so
    # the concat is essentially free and gives a single K=256 MXU contraction.
    emb = jnp.concatenate([jnp.cos(args), jnp.sin(args)], axis=-1)  # (TILE_N, 2*half)

    h = (jnp.dot(emb, w1_ref[...], preferred_element_type=jnp.float32)
         + b1_ref[...])                   # (TILE_N, H)
    h = h * jax.nn.sigmoid(h)             # SiLU

    out = (jnp.dot(h, w2_ref[...], preferred_element_type=jnp.float32)
           + b2_ref[...])                 # (TILE_N, H)
    # TODO(synk): with production hidden_size >= 128 (multiple of 128) this
    # store becomes lane-dense automatically; for H=32 a lane-dense repack
    # (view out as (N*H/128, 128)) is an optional further win on v5e.
    out_ref[...] = out.astype(out_ref.dtype)


def make_freq_table(frequency_embedding_size=FREQ_EMB_SIZE,
                    max_period=MAX_PERIOD):
    """Build the sinusoidal frequency table once (hoisted out of forward)."""
    half = frequency_embedding_size // 2
    return jnp.exp(
        -math.log(max_period) * jnp.arange(half, dtype=jnp.float32) / half
    ).reshape(1, half)


def timestep_embedder(t, params, freqs, *, tile_n=DEFAULT_TILE_N):
    """t: (N,) f32 timesteps. Returns (N, hidden) f32 embeddings."""
    w1, b1, w2, b2 = params
    n = t.shape[0]
    f, hidden = w1.shape
    half = freqs.shape[1]
    assert f == 2 * half, "frequency_embedding_size must be even here"

    # Tile size: big enough to keep the EUP (sin/cos/sigmoid) fed and hide
    # DMA + per-step overhead, but never larger than the (8-padded) problem.
    tile = min(tile_n, _round_up(n, 8))
    padded_n = _round_up(n, tile)
    num_tiles = padded_n // tile

    t2d = t.astype(jnp.float32).reshape(n, 1)
    if padded_n != n:
        t2d = jnp.pad(t2d, ((0, padded_n - n), (0, 0)))
    b1_2d = b1.reshape(1, hidden)
    b2_2d = b2.reshape(1, hidden)

    cost = pl.CostEstimate(
        flops=2 * padded_n * (f * hidden + hidden * hidden),
        transcendentals=padded_n * (f + hidden),       # sin/cos + sigmoid
        bytes_accessed=4 * (padded_n * (1 + hidden) + half
                            + f * hidden + hidden + hidden * hidden + hidden),
    )

    out = pl.pallas_call(
        _timestep_embedder_kernel,
        out_shape=jax.ShapeDtypeStruct((padded_n, hidden), jnp.float32),
        grid=(num_tiles,),
        in_specs=[
            pl.BlockSpec((tile, 1), lambda i: (i, 0)),         # t (streamed)
            pl.BlockSpec((1, half), lambda i: (0, 0)),         # freqs (resident)
            pl.BlockSpec((f, hidden), lambda i: (0, 0)),       # w1 (resident)
            pl.BlockSpec((1, hidden), lambda i: (0, 0)),       # b1 (resident)
            pl.BlockSpec((hidden, hidden), lambda i: (0, 0)),  # w2 (resident)
            pl.BlockSpec((1, hidden), lambda i: (0, 0)),       # b2 (resident)
        ],
        out_specs=pl.BlockSpec((tile, hidden), lambda i: (i, 0)),
        compiler_params=pltpu.CompilerParams(
            dimension_semantics=("parallel",),
            vmem_limit_bytes=32 * 1024 * 1024,
        ),
        cost_estimate=cost,
    )(t2d, freqs, w1, b1_2d, w2, b2_2d)

    return out[:n] if padded_n != n else out


def _reference(t, params, frequency_embedding_size=FREQ_EMB_SIZE):
    """Pure-JAX reference mirroring the PyTorch module."""
    w1, b1, w2, b2 = params
    half = frequency_embedding_size // 2
    freqs = jnp.exp(
        -math.log(MAX_PERIOD) * jnp.arange(half, dtype=jnp.float32) / half)
    args = t.astype(jnp.float32)[:, None] * freqs[None]
    emb = jnp.concatenate([jnp.cos(args), jnp.sin(args)], axis=-1)
    # frequency_embedding_size is even here, so no zero-pad column needed.
    h = emb @ w1 + b1
    h = h * jax.nn.sigmoid(h)
    return h @ w2 + b2


def init_params(key, hidden_size=HIDDEN_SIZE,
                frequency_embedding_size=FREQ_EMB_SIZE):
    k1, k2, k3, k4 = jax.random.split(key, 4)
    # Shapes match nn.Linear weights, stored transposed so the kernel does x @ W.
    w1 = jax.random.normal(k1, (frequency_embedding_size, hidden_size),
                           jnp.float32) * 0.02
    b1 = jax.random.normal(k2, (hidden_size,), jnp.float32) * 0.02
    w2 = jax.random.normal(k3, (hidden_size, hidden_size), jnp.float32) * 0.02
    b2 = jax.random.normal(k4, (hidden_size,), jnp.float32) * 0.02
    return w1, b1, w2, b2


if __name__ == "__main__":
    key = jax.random.PRNGKey(0)
    pkey, tkey1, tkey2 = jax.random.split(key, 3)

    params = init_params(pkey)
    freqs = make_freq_table()  # built once, passed into every forward

    # Small demo batch (matches the module spec: t is a 1-D tensor of N
    # fractional timesteps, e.g. diffusion timesteps in [0, 1000)).
    N = 8
    t = jax.random.uniform(tkey1, (N,), jnp.float32) * 1000.0
    out = jax.block_until_ready(timestep_embedder(t, params, freqs))
    ref = _reference(t, params)
    assert out.shape == (N, HIDDEN_SIZE)
    assert jnp.allclose(out, ref, atol=1e-4, rtol=1e-4), (
        f"max abs err {jnp.max(jnp.abs(out - ref))}")

    # Larger batch: exercises the N grid (multiple tiles) and the tail-padding
    # path (300 is not a multiple of TILE_N=256).
    N2 = 300
    t2 = jax.random.uniform(tkey2, (N2,), jnp.float32) * 1000.0
    out2 = jax.block_until_ready(timestep_embedder(t2, params, freqs))
    ref2 = _reference(t2, params)
    assert out2.shape == (N2, HIDDEN_SIZE)
    assert jnp.allclose(out2, ref2, atol=1e-4, rtol=1e-4), (
        f"max abs err {jnp.max(jnp.abs(out2 - ref2))}")

    print("KERNEL_OK")
</pallas_src>

<mosaic_0001>
module attributes {stable_mosaic.version = 11 : i64} {
  func.func @_timestep_embedder_kernel(%arg0: i32, %arg1: memref<8x1xf32, #tpu.memory_space<vmem>>, %arg2: memref<1x128xf32, #tpu.memory_space<vmem>>, %arg3: memref<256x32xf32, #tpu.memory_space<vmem>>, %arg4: memref<1x32xf32, #tpu.memory_space<vmem>>, %arg5: memref<32x32xf32, #tpu.memory_space<vmem>>, %arg6: memref<1x32xf32, #tpu.memory_space<vmem>>, %arg7: memref<8x32xf32, #tpu.memory_space<vmem>>) attributes {dimension_semantics = [#tpu.dimension_semantics<parallel>], iteration_bounds = array<i64: 1>, scalar_prefetch = 0 : i64, scratch_operands = 0 : i64, tpu.core_type = #tpu.core_type<tc>, window_params = [{transform_indices = @transform_0, window_bounds = array<i64: 8, 1>}, {pipeline_mode = #tpu.pipeline_mode<synchronous>, transform_indices = @transform_1, window_bounds = array<i64: 1, 128>}, {pipeline_mode = #tpu.pipeline_mode<synchronous>, transform_indices = @transform_2, window_bounds = array<i64: 256, 32>}, {pipeline_mode = #tpu.pipeline_mode<synchronous>, transform_indices = @transform_3, window_bounds = array<i64: 1, 32>}, {pipeline_mode = #tpu.pipeline_mode<synchronous>, transform_indices = @transform_4, window_bounds = array<i64: 32, 32>}, {pipeline_mode = #tpu.pipeline_mode<synchronous>, transform_indices = @transform_5, window_bounds = array<i64: 1, 32>}, {transform_indices = @transform_6, window_bounds = array<i64: 8, 32>}]} {
    %c0 = arith.constant 0 : index
    %c0_0 = arith.constant 0 : index
    %0 = vector.load %arg1[%c0, %c0_0] : memref<8x1xf32, #tpu.memory_space<vmem>>, vector<8x1xf32>
    %c0_1 = arith.constant 0 : index
    %c0_2 = arith.constant 0 : index
    %1 = vector.load %arg2[%c0_1, %c0_2] : memref<1x128xf32, #tpu.memory_space<vmem>>, vector<1x128xf32>
    %2 = vector.broadcast %0 : vector<8x1xf32> to vector<8x128xf32>
    %3 = vector.broadcast %1 : vector<1x128xf32> to vector<8x128xf32>
    %4 = arith.mulf %2, %3 : vector<8x128xf32>
    %5 = math.cos %4 : vector<8x128xf32>
    %6 = math.sin %4 : vector<8x128xf32>
    %7 = tpu.concatenate %5, %6 in 1 : vector<8x128xf32>, vector<8x128xf32> -> vector<8x256xf32>
    %c0_3 = arith.constant 0 : index
    %c0_4 = arith.constant 0 : index
    %8 = vector.load %arg3[%c0_3, %c0_4] : memref<256x32xf32, #tpu.memory_space<vmem>>, vector<256x32xf32>
    %cst = arith.constant dense<0.000000e+00> : vector<8x32xf32>
    %9 = tpu.matmul %7, %8, %cst {dimension_numbers = #tpu.dot_dimension_numbers<[1], [0], [0], [1], [0, 0, 1, 1], [], []>} : vector<8x256xf32>, vector<256x32xf32>, vector<8x32xf32> -> vector<8x32xf32>
    %c0_5 = arith.constant 0 : index
    %c0_6 = arith.constant 0 : index
    %10 = vector.load %arg4[%c0_5, %c0_6] : memref<1x32xf32, #tpu.memory_space<vmem>>, vector<1x32xf32>
    %11 = vector.broadcast %10 : vector<1x32xf32> to vector<8x32xf32>
    %12 = arith.addf %9, %11 : vector<8x32xf32>
    %13 = arith.negf %12 : vector<8x32xf32>
    %14 = math.exp %13 : vector<8x32xf32>
    %cst_7 = arith.constant 1.000000e+00 : f32
    %15 = vector.broadcast %cst_7 : f32 to vector<8x32xf32>
    %16 = arith.addf %15, %14 : vector<8x32xf32>
    %17 = arith.divf %15, %16 : vector<8x32xf32>
    %18 = arith.mulf %12, %17 : vector<8x32xf32>
    %c0_8 = arith.constant 0 : index
    %c0_9 = arith.constant 0 : index
    %19 = vector.load %arg5[%c0_8, %c0_9] : memref<32x32xf32, #tpu.memory_space<vmem>>, vector<32x32xf32>
    %cst_10 = arith.constant dense<0.000000e+00> : vector<8x32xf32>
    %20 = tpu.matmul %18, %19, %cst_10 {dimension_numbers = #tpu.dot_dimension_numbers<[1], [0], [0], [1], [0, 0, 1, 1], [], []>} : vector<8x32xf32>, vector<32x32xf32>, vector<8x32xf32> -> vector<8x32xf32>
    %c0_11 = arith.constant 0 : index
    %c0_12 = arith.constant 0 : index
    %21 = vector.load %arg6[%c0_11, %c0_12] : memref<1x32xf32, #tpu.memory_space<vmem>>, vector<1x32xf32>
    %22 = vector.broadcast %21 : vector<1x32xf32> to vector<8x32xf32>
    %23 = arith.addf %20, %22 : vector<8x32xf32>
    %c0_13 = arith.constant 0 : index
    %c0_14 = arith.constant 0 : index
    %24 = vector.load %arg7[%c0_13, %c0_14] : memref<8x32xf32, #tpu.memory_space<vmem>>, vector<8x32xf32>
    tpu.vector_store %arg7[%c0_13, %c0_14], %23 {strides = array<i32>} : memref<8x32xf32, #tpu.memory_space<vmem>>, vector<8x32xf32>,
    return
  }
  func.func @transform_0(%arg0: i32) -> (i32, i32) {
    %c0_i32 = arith.constant 0 : i32
    %c0_i32_0 = arith.constant 0 : i32
    return %arg0, %c0_i32 : i32, i32
  }
  func.func @transform_1(%arg0: i32) -> (i32, i32) {
    %c0_i32 = arith.constant 0 : i32
    %c0_i32_0 = arith.constant 0 : i32
    %c0_i32_1 = arith.constant 0 : i32
    return %c0_i32, %c0_i32_0 : i32, i32
  }
  func.func @transform_2(%arg0: i32) -> (i32, i32) {
    %c0_i32 = arith.constant 0 : i32
    %c0_i32_0 = arith.constant 0 : i32
    %c0_i32_1 = arith.constant 0 : i32
    return %c0_i32, %c0_i32_0 : i32, i32
  }
  func.func @transform_3(%arg0: i32) -> (i32, i32) {
    %c0_i32 = arith.constant 0 : i32
    %c0_i32_0 = arith.constant 0 : i32
    %c0_i32_1 = arith.constant 0 : i32
    return %c0_i32, %c0_i32_0 : i32, i32
  }
  func.func @transform_4(%arg0: i32) -> (i32, i32) {
    %c0_i32 = arith.constant 0 : i32
    %c0_i32_0 = arith.constant 0 : i32
    %c0_i32_1 = arith.constant 0 : i32
    return %c0_i32, %c0_i32_0 : i32, i32
  }
  func.func @transform_5(%arg0: i32) -> (i32, i32) {
    %c0_i32 = arith.constant 0 : i32
    %c0_i32_0 = arith.constant 0 : i32
    %c0_i32_1 = arith.constant 0 : i32
    return %c0_i32, %c0_i32_0 : i32, i32
  }
  func.func @transform_6(%arg0: i32) -> (i32, i32) {
    %c0_i32 = arith.constant 0 : i32
    %c0_i32_0 = arith.constant 0 : i32
    return %arg0, %c0_i32 : i32, i32
  }
}

</mosaic_0001>

<llo_original>
// kernel: tpu_custom_call.1
$region0: #{tpu_custom_call.1}
  #allocation0 [shape = 'u32[]', space=smem, size = 0x4, offset = 0x4, fixed_abs, tag = 'smem constant byte address 0x4 - core index']
  #allocation1 [shape = 'u32[72,128]{1,0:T(1,128)}', space=vmem, size = 0x9000, scoped, tag = 'internal scratch']
  %s0 = inlined_call_operand.vmem [shape: f32[8,1], index: 0, kind: input, shape index: {}]
  %s1 = inlined_call_operand.vmem [shape: f32[1,128], index: 1, kind: input, shape index: {}]
  %s2 = inlined_call_operand.vmem [shape: f32[256,32], index: 2, kind: input, shape index: {}]
  %s3 = inlined_call_operand.vmem [shape: f32[1,32], index: 3, kind: input, shape index: {}]
  %s4 = inlined_call_operand.vmem [shape: f32[32,32], index: 4, kind: input, shape index: {}]
  %s5 = inlined_call_operand.vmem [shape: f32[1,32], index: 5, kind: input, shape index: {}]
  %s6 = inlined_call_operand.hbm [shape: f32[8,32], index: 6, kind: output, shape index: {}]
  %s7 = sld [smem:[#allocation0]]
  $region34: #{tpu_custom_call.1} parent=0
    _
  %s9 = ssub.s32 1, %s7
  %s10 = scalar_select 0, %s9, %s7
  $region1: #{tpu_custom_call.1} parent=0
    #allocation2 [shape = 'u8[4096]{0}', space=vmem, size = 0x1000, scoped, tag = 'output window, operand 0, single buffered']
    #allocation3 [shape = 's32[1]{0}', space=sflag, size = 0x4, scoped, tag = 'scoped memory for tpu_custom_call.1']
    %11 = vsyncpa [#allocation3], 0
    // Predicated region
    $region2: #{tpu_custom_call.1} parent=1 // pred_check
      _
    $region3: #{tpu_custom_call.1} parent=1 // pred_check_branch
      %13 = sbr.rel (0) target = $region5
    $region4: #{tpu_custom_call.1} parent=1 // pred_region
      _
    $region5: #{tpu_custom_call.1} parent=1 // pred_fallthru
      _
    // Predicated region
    $region6: #{tpu_custom_call.1} parent=1 // pred_check
      _
    $region7: #{tpu_custom_call.1} parent=1 // pred_check_branch
      %15 = sbr.rel (0) target = $region9
    $region8: #{tpu_custom_call.1} parent=1 // pred_region
      _
    $region9: #{tpu_custom_call.1} parent=1 // pred_fallthru
      _
    // Predicated region
    $region10: #{tpu_custom_call.1} parent=1 // pred_check
      _
    $region11: #{tpu_custom_call.1} parent=1 // pred_check_branch
      %17 = sbr.rel (0) target = $region13
    $region12: #{tpu_custom_call.1} parent=1 // pred_region
      _
    $region13: #{tpu_custom_call.1} parent=1 // pred_fallthru
      _
    // Predicated region
    $region14: #{tpu_custom_call.1} parent=1 // pred_check
      _
    $region15: #{tpu_custom_call.1} parent=1 // pred_check_branch
      %19 = sbr.rel (0) target = $region17
    $region16: #{tpu_custom_call.1} parent=1 // pred_region
      _
    $region17: #{tpu_custom_call.1} parent=1 // pred_fallthru
      _
    // Predicated region
    $region18: #{tpu_custom_call.1} parent=1 // pred_check
      _
    $region19: #{tpu_custom_call.1} parent=1 // pred_check_branch
      %21 = sbr.rel (0) target = $region21
    $region20: #{tpu_custom_call.1} parent=1 // pred_region
      _
    $region21: #{tpu_custom_call.1} parent=1 // pred_fallthru
      _
    // Predicated region
    $region22: #{tpu_custom_call.1} parent=1 // pred_check
      _
    $region23: #{tpu_custom_call.1} parent=1 // pred_check_branch
      %23 = sbr.rel (0) target = $region25
    $region24: #{tpu_custom_call.1} parent=1 // pred_region
      _
    $region25: #{tpu_custom_call.1} parent=1 // pred_fallthru
      _
    %v24 = vld [vmem:[%s0] sm:$0xff]
    %v25 = vld [vmem:[%s1] sm:$0x1]
    %27 = vset.pattern.permute.xlu0 0
    %28 = vperm.xlu0 %27, %v24
    %v29 = vpop.permute.xlu0 %28
    %v32 = vperm.slane %v25, 0
    %v34 = vmul.f32 %v29, %v32
    %v35 = vand.u32 2147483647, %v34
    %vm36 = vcmp.le.f32.partialorder %v35, 0.7853982
    %vm37 = vcmp.lt.s32.totalorder %v34, 0
    %v38 = vand.u32 %v34, 2139095040
    %v39 = vshrl.u32 %v38, 23
    %v40 = vsub.s32 %v39, 127
    %v41 = vand.u32 2147483647, %v34
    %v42 = vand.u32 %v41, 8388607
    %v43 = vor.u32 %v42, 8388608
    %v44 = vsub.s32 0, %v43
    %v45 = vadd.s32 %v40, 1
    %vm46 = vcmp.gt.s32.totalorder %v45, 0
    %v47 = vsel %vm46, %v45, 0
    %v48 = vshrl.u32 %v47, 5
    %v49 = vand.u32 %v47, 31
    %v50 = vsub.s32 32, %v49
    %v51 = vshrl.u32 683565275, %v50
    %v52 = vshll.u32 683565275, %v49
    %v53 = vshrl.u32 2475754826, %v50
    %v54 = vor.u32 %v52, %v53
    %v55 = vshll.u32 2475754826, %v49
    %v56 = vshrl.u32 2131351028, %v50
    %v57 = vor.u32 %v55, %v56
    %v58 = vshll.u32 2131351028, %v49
    %v59 = vshrl.u32 2102212464, %v50
    %v60 = vor.u32 %v58, %v59
    %v61 = vshll.u32 2102212464, %v49
    %v62 = vshrl.u32 920167782, %v50
    %v63 = vor.u32 %v61, %v62
    %v64 = vshll.u32 920167782, %v49
    %v65 = vshrl.u32 1326507024, %v50
    %v66 = vor.u32 %v64, %v65
    %vm67 = vcmp.lt.s32.totalorder %v48, 1
    %vm68 = vcmp.lt.s32.totalorder %v48, 2
    %vm69 = vcmp.lt.s32.totalorder %v48, 3
    %vm70 = vcmp.lt.s32.totalorder %v48, 4
    %v71 = vsel %vm67, %v51, %v54
    %v72 = vsel %vm70, %v60, 2102212464
    %v73 = vsel %vm69, %v57, %v72
    %v74 = vsel %vm68, %v71, %v73
    %v75 = vsel %vm67, %v54, %v57
    %v76 = vsel %vm70, %v63, 920167782
    %v77 = vsel %vm69, %v60, %v76
    %v78 = vsel %vm68, %v75, %v77
    %v79 = vsel %vm67, %v57, %v60
    %v80 = vsel %vm70, %v66, 1326507024
    %v81 = vsel %vm69, %v63, %v80
    %v82 = vsel %vm68, %v79, %v81
    %v83 = vshll.u32 %v43, 8
    %v84 = vand.u32 %v83, 65535
    %v85 = vshrl.u32 %v83, 16
    %v86 = vand.u32 %v82, 65535
    %v87 = vshrl.u32 %v82, 16
    %v88 = vmul.u32 %v84, %v86
    %v89 = vmul.u32 %v84, %v87
    %v90 = vmul.u32 %v85, %v86
    %v91 = vmul.u32 %v85, %v87
    %v92 = vshll.u32 %v89, 16
    %v93 = vshrl.u32 %v89, 16
    %v94 = vshll.u32 %v90, 16
    %v95 = vshrl.u32 %v90, 16
    %vm96 = vc.u32 %v88, %v92
    %v97 = vsel %vm96, 1, 0
    %v98 = vadd.s32 %v88, %v92
    %v99 = vadd.s32 %v91, %v97
    %vm100 = vc.u32 %v98, %v94
    %v101 = vsel %vm100, 1, 0
    %v102 = vadd.s32 %v98, %v94
    %v103 = vadd.s32 %v99, %v101
    %v104 = vadd.s32 %v103, %v93
    %v105 = vadd.s32 %v104, %v95
    %v106 = vand.u32 %v83, 65535
    %v107 = vshrl.u32 %v83, 16
    %v108 = vand.u32 %v78, 65535
    %v109 = vshrl.u32 %v78, 16
    %v110 = vmul.u32 %v106, %v108
    %v111 = vmul.u32 %v106, %v109
    %v112 = vmul.u32 %v107, %v108
    %v113 = vmul.u32 %v107, %v109
    %v114 = vshll.u32 %v111, 16
    %v115 = vshrl.u32 %v111, 16
    %v116 = vshll.u32 %v112, 16
    %v117 = vshrl.u32 %v112, 16
    %vm118 = vc.u32 %v110, %v114
    %v119 = vsel %vm118, 1, 0
    %v120 = vadd.s32 %v110, %v114
    %v121 = vadd.s32 %v113, %v119
    %vm122 = vc.u32 %v120, %v116
    %v123 = vsel %vm122, 1, 0
    %v124 = vadd.s32 %v120, %v116
    %v125 = vadd.s32 %v121, %v123
    %v126 = vadd.s32 %v125, %v115
    %v127 = vadd.s32 %v126, %v117
    %v128 = vmul.u32 %v83, %v74
    %v129 = vadd.s32 %v105, %v124
    %vm130 = vc.u32 %v105, %v124
    %v131 = vadd.s32 %v127, 1
    %v132 = vsel %vm130, %v131, %v127
    %v133 = vadd.s32 %v128, %v132
    %v134 = vadd.s32 %v133, 536870912
    %v135 = vshrl.u32 %v134, 30
    %v136 = vshll.u32 %v135, 30
    %v137 = vsub.s32 %v133, %v136
    %vm138 = vcmp.lt.s32.totalorder %v137, 0
    %v139 = vsub.s32 0, %v137
    %v140 = vsel %vm138, %v139, %v137
    %v141 = vclz %v140
    %v142 = vsub.s32 %v141, 2
    %vm143 = vcmp.gt.s32.totalorder 0, %v142
    %v144 = vsel %vm143, 0, %v142
    %v145 = vsub.s32 32, %v144
    %v146 = vshll.u32 %v137, %v144
    %v147 = vshrl.u32 %v129, %v145
    %v148 = vor.u32 %v146, %v147
    %v149 = vsub.s32 4294967266, %v144
    %v150 = vadd.s32 %v149, 127
    %v151 = vshll.u32 %v150, 23
    %v152 = vor.u32 4788187, %v151
    %v153 = vand.u32 2147483647, %v152
    %v155 = vcvt.s32.f32 %v148
    %v156 = vmul.f32 %v155, %v153
    %v157 = vxor.u32 %v156, 2147483648
    %v158 = vsel %vm37, %v157, %v156
    %v159 = vsub.s32 4, %v135
    %v160 = vsel %vm37, %v159, %v135
    %v161 = vsel %vm36, %v34, %v158
    %v162 = vsel %vm36, 0, %v160
    %v163 = vmul.f32 %v161, %v161
    %v164 = vmul.f32 %v163, -0.001358992
    %v165 = vadd.f32 %v164, 0.041655596
    %v166 = vmul.f32 %v163, %v165
    %v167 = vadd.f32 %v166, -0.4999988
    %v168 = vmul.f32 %v163, %v167
    %v169 = vadd.f32 1.0, %v168
    %v170 = vmul.f32 %v161, %v161
    %v171 = vmul.f32 %v170, -0.00019511016
    %v172 = vadd.f32 %v171, 0.008332121
    %v173 = vmul.f32 %v170, %v172
    %v174 = vadd.f32 %v173, -0.16666654
    %v175 = vmul.f32 %v170, %v174
    %v176 = vadd.f32 %v175, 1.0
    %v177 = vmul.f32 %v176, %v161
    %vm178 = vweird.f32 %v34
    %v179 = vand.u32 %v162, 3
    %vm180 = vcmp.lt.s32.totalorder %v179, 2
    %vm181 = vcmp.eq.s32.totalorder %v179, 0
    %v182 = vxor.u32 %v177, 2147483648
    %v183 = vsel %vm181, %v169, %v182
    %vm184 = vcmp.eq.s32.totalorder %v179, 2
    %v185 = vxor.u32 %v169, 2147483648
    %v186 = vsel %vm184, %v185, %v177
    %v187 = vsel %vm180, %v183, %v186
    %v188 = vsel %vm178, nan, %v187
    %v189 = vand.u32 2147483647, %v34
    %vm190 = vcmp.le.f32.partialorder %v189, 0.7853982
    %vm191 = vcmp.lt.s32.totalorder %v34, 0
    %v192 = vand.u32 %v34, 2139095040
    %v193 = vshrl.u32 %v192, 23
    %v194 = vsub.s32 %v193, 127
    %v195 = vand.u32 2147483647, %v34
    %v196 = vand.u32 %v195, 8388607
    %v197 = vor.u32 %v196, 8388608
    %v198 = vsub.s32 0, %v197
    %v199 = vadd.s32 %v194, 1
    %vm200 = vcmp.gt.s32.totalorder %v199, 0
    %v201 = vsel %vm200, %v199, 0
    %v202 = vshrl.u32 %v201, 5
    %v203 = vand.u32 %v201, 31
    %v204 = vsub.s32 32, %v203
    %v205 = vshrl.u32 683565275, %v204
    %v206 = vshll.u32 683565275, %v203
    %v207 = vshrl.u32 2475754826, %v204
    %v208 = vor.u32 %v206, %v207
    %v209 = vshll.u32 2475754826, %v203
    %v210 = vshrl.u32 2131351028, %v204
    %v211 = vor.u32 %v209, %v210
    %v212 = vshll.u32 2131351028, %v203
    %v213 = vshrl.u32 2102212464, %v204
    %v214 = vor.u32 %v212, %v213
    %v215 = vshll.u32 2102212464, %v203
    %v216 = vshrl.u32 920167782, %v204
    %v217 = vor.u32 %v215, %v216
    %v218 = vshll.u32 920167782, %v203
    %v219 = vshrl.u32 1326507024, %v204
    %v220 = vor.u32 %v218, %v219
    %vm221 = vcmp.lt.s32.totalorder %v202, 1
    %vm222 = vcmp.lt.s32.totalorder %v202, 2
    %vm223 = vcmp.lt.s32.totalorder %v202, 3
    %vm224 = vcmp.lt.s32.totalorder %v202, 4
    %v225 = vsel %vm221, %v205, %v208
    %v226 = vsel %vm224, %v214, 2102212464
    %v227 = vsel %vm223, %v211, %v226
    %v228 = vsel %vm222, %v225, %v227
    %v229 = vsel %vm221, %v208, %v211
    %v230 = vsel %vm224, %v217, 920167782
    %v231 = vsel %vm223, %v214, %v230
    %v232 = vsel %vm222, %v229, %v231
    %v233 = vsel %vm221, %v211, %v214
    %v234 = vsel %vm224, %v220, 1326507024
    %v235 = vsel %vm223, %v217, %v234
    %v236 = vsel %vm222, %v233, %v235
    %v237 = vshll.u32 %v197, 8
    %v238 = vand.u32 %v237, 65535
    %v239 = vshrl.u32 %v237, 16
    %v240 = vand.u32 %v236, 65535
    %v241 = vshrl.u32 %v236, 16
    %v242 = vmul.u32 %v238, %v240
    %v243 = vmul.u32 %v238, %v241
    %v244 = vmul.u32 %v239, %v240
    %v245 = vmul.u32 %v239, %v241
    %v246 = vshll.u32 %v243, 16
    %v247 = vshrl.u32 %v243, 16
    %v248 = vshll.u32 %v244, 16
    %v249 = vshrl.u32 %v244, 16
    %vm250 = vc.u32 %v242, %v246
    %v251 = vsel %vm250, 1, 0
    %v252 = vadd.s32 %v242, %v246
    %v253 = vadd.s32 %v245, %v251
    %vm254 = vc.u32 %v252, %v248
    %v255 = vsel %vm254, 1, 0
    %v256 = vadd.s32 %v252, %v248
    %v257 = vadd.s32 %v253, %v255
    %v258 = vadd.s32 %v257, %v247
    %v259 = vadd.s32 %v258, %v249
    %v260 = vand.u32 %v237, 65535
    %v261 = vshrl.u32 %v237, 16
    %v262 = vand.u32 %v232, 65535
    %v263 = vshrl.u32 %v232, 16
    %v264 = vmul.u32 %v260, %v262
    %v265 = vmul.u32 %v260, %v263
    %v266 = vmul.u32 %v261, %v262
    %v267 = vmul.u32 %v261, %v263
    %v268 = vshll.u32 %v265, 16
    %v269 = vshrl.u32 %v265, 16
    %v270 = vshll.u32 %v266, 16
    %v271 = vshrl.u32 %v266, 16
    %vm272 = vc.u32 %v264, %v268
    %v273 = vsel %vm272, 1, 0
    %v274 = vadd.s32 %v264, %v268
    %v275 = vadd.s32 %v267, %v273
    %vm276 = vc.u32 %v274, %v270
    %v277 = vsel %vm276, 1, 0
    %v278 = vadd.s32 %v274, %v270
    %v279 = vadd.s32 %v275, %v277
    %v280 = vadd.s32 %v279, %v269
    %v281 = vadd.s32 %v280, %v271
    %v282 = vmul.u32 %v237, %v228
    %v283 = vadd.s32 %v259, %v278
    %vm284 = vc.u32 %v259, %v278
    %v285 = vadd.s32 %v281, 1
    %v286 = vsel %vm284, %v285, %v281
    %v287 = vadd.s32 %v282, %v286
    %v288 = vadd.s32 %v287, 536870912
    %v289 = vshrl.u32 %v288, 30
    %v290 = vshll.u32 %v289, 30
    %v291 = vsub.s32 %v287, %v290
    %vm292 = vcmp.lt.s32.totalorder %v291, 0
    %v293 = vsub.s32 0, %v291
    %v294 = vsel %vm292, %v293, %v291
    %v295 = vclz %v294
    %v296 = vsub.s32 %v295, 2
    %vm297 = vcmp.gt.s32.totalorder 0, %v296
    %v298 = vsel %vm297, 0, %v296
    %v299 = vsub.s32 32, %v298
    %v300 = vshll.u32 %v291, %v298
    %v301 = vshrl.u32 %v283, %v299
    %v302 = vor.u32 %v300, %v301
    %v303 = vsub.s32 4294967266, %v298
    %v304 = vadd.s32 %v303, 127
    %v305 = vshll.u32 %v304, 23
    %v306 = vor.u32 4788187, %v305
    %v307 = vand.u32 2147483647, %v306
    %v309 = vcvt.s32.f32 %v302
    %v310 = vmul.f32 %v309, %v307
    %v311 = vxor.u32 %v310, 2147483648
    %v312 = vsel %vm191, %v311, %v310
    %v313 = vsub.s32 4, %v289
    %v314 = vsel %vm191, %v313, %v289
    %v315 = vsel %vm190, %v34, %v312
    %v316 = vsel %vm190, 0, %v314
    %v317 = vmul.f32 %v315, %v315
    %v318 = vmul.f32 %v317, -0.001358992
    %v319 = vadd.f32 %v318, 0.041655596
    %v320 = vmul.f32 %v317, %v319
    %v321 = vadd.f32 %v320, -0.4999988
    %v322 = vmul.f32 %v317, %v321
    %v323 = vadd.f32 1.0, %v322
    %v324 = vmul.f32 %v315, %v315
    %v325 = vmul.f32 %v324, -0.00019511016
    %v326 = vadd.f32 %v325, 0.008332121
    %v327 = vmul.f32 %v324, %v326
    %v328 = vadd.f32 %v327, -0.16666654
    %v329 = vmul.f32 %v324, %v328
    %v330 = vadd.f32 %v329, 1.0
    %v331 = vmul.f32 %v330, %v315
    %vm332 = vweird.f32 %v34
    %v333 = vadd.s32 %v316, 3
    %v334 = vand.u32 %v333, 3
    %vm335 = vcmp.lt.s32.totalorder %v334, 2
    %vm336 = vcmp.eq.s32.totalorder %v334, 0
    %v337 = vxor.u32 %v331, 2147483648
    %v338 = vsel %vm336, %v323, %v337
    %vm339 = vcmp.eq.s32.totalorder %v334, 2
    %v340 = vxor.u32 %v323, 2147483648
    %v341 = vsel %vm339, %v340, %v331
    %v342 = vsel %vm335, %v338, %v341
    %v343 = vsel %vm332, nan, %v342
    %v344 = vld [vmem:[%s2] sm:$0xff]
    %v345 = vld [vmem:[%s2 + $0x8] sm:$0xff]
    %v346 = vld [vmem:[%s2 + $0x10] sm:$0xff]
    %v347 = vld [vmem:[%s2 + $0x18] sm:$0xff]
    %v348 = vld [vmem:[%s2 + $0x20] sm:$0xff]
    %v349 = vld [vmem:[%s2 + $0x28] sm:$0xff]
    %v350 = vld [vmem:[%s2 + $0x30] sm:$0xff]
    %v351 = vld [vmem:[%s2 + $0x38] sm:$0xff]
    %v352 = vld [vmem:[%s2 + $0x40] sm:$0xff]
    %v353 = vld [vmem:[%s2 + $0x48] sm:$0xff]
    %v354 = vld [vmem:[%s2 + $0x50] sm:$0xff]
    %v355 = vld [vmem:[%s2 + $0x58] sm:$0xff]
    %v356 = vld [vmem:[%s2 + $0x60] sm:$0xff]
    %v357 = vld [vmem:[%s2 + $0x68] sm:$0xff]
    %v358 = vld [vmem:[%s2 + $0x70] sm:$0xff]
    %v359 = vld [vmem:[%s2 + $0x78] sm:$0xff]
    %v360 = vld [vmem:[%s2 + $0x80] sm:$0xff]
    %v361 = vld [vmem:[%s2 + $0x88] sm:$0xff]
    %v362 = vld [vmem:[%s2 + $0x90] sm:$0xff]
    %v363 = vld [vmem:[%s2 + $0x98] sm:$0xff]
    %v364 = vld [vmem:[%s2 + $0xa0] sm:$0xff]
    %v365 = vld [vmem:[%s2 + $0xa8] sm:$0xff]
    %v366 = vld [vmem:[%s2 + $0xb0] sm:$0xff]
    %v367 = vld [vmem:[%s2 + $0xb8] sm:$0xff]
    %v368 = vld [vmem:[%s2 + $0xc0] sm:$0xff]
    %v369 = vld [vmem:[%s2 + $0xc8] sm:$0xff]
    %v370 = vld [vmem:[%s2 + $0xd0] sm:$0xff]
    %v371 = vld [vmem:[%s2 + $0xd8] sm:$0xff]
    %v372 = vld [vmem:[%s2 + $0xe0] sm:$0xff]
    %v373 = vld [vmem:[%s2 + $0xe8] sm:$0xff]
    %v374 = vld [vmem:[%s2 + $0xf0] sm:$0xff]
    %v375 = vld [vmem:[%s2 + $0xf8] sm:$0xff]
    %v376 = vld [vmem:[%s3] sm:$0x1]
    %v378 = vperm.slane %v376, 0
    %380 = vmatpush.msra.mxu0 %v359
    %381 = vmatpush.msra.mxu0 %v358
    %382 = vmatpush.msra.mxu0 %v357
    %383 = vmatpush.msra.mxu0 %v356
    %384 = vmatpush.msra.mxu0 %v355
    %385 = vmatpush.msra.mxu0 %v354
    %386 = vmatpush.msra.mxu0 %v353
    %387 = vmatpush.msra.mxu0 %v352
    %388 = vmatpush.msra.mxu0 %v351
    %389 = vmatpush.msra.mxu0 %v350
    %390 = vmatpush.msra.mxu0 %v349
    %391 = vmatpush.msra.mxu0 %v348
    %392 = vmatpush.msra.mxu0 %v347
    %393 = vmatpush.msra.mxu0 %v346
    %394 = vmatpush.msra.mxu0 %v345
    %395 = vmatpush.msra.mxu0 %v344
    %396 = vmatmul.f32.gmra.mxu0 %v188
    %v397 = vpop.f32.mrf.mxu0
    %v398 = vadd.f32 %v378, %v397
    %399 = vdwg.mxu0
    %400 = vmatpush.msra.mxu0 %v375
    %401 = vmatpush.msra.mxu0 %v374
    %402 = vmatpush.msra.mxu0 %v373
    %403 = vmatpush.msra.mxu0 %v372
    %404 = vmatpush.msra.mxu0 %v371
    %405 = vmatpush.msra.mxu0 %v370
    %406 = vmatpush.msra.mxu0 %v369
    %407 = vmatpush.msra.mxu0 %v368
    %408 = vmatpush.msra.mxu0 %v367
    %409 = vmatpush.msra.mxu0 %v366
    %410 = vmatpush.msra.mxu0 %v365
    %411 = vmatpush.msra.mxu0 %v364
    %412 = vmatpush.msra.mxu0 %v363
    %413 = vmatpush.msra.mxu0 %v362
    %414 = vmatpush.msra.mxu0 %v361
    %415 = vmatpush.msra.mxu0 %v360
    %416 = vmatmul.f32.gmra.mxu0 %v343
    %v417 = vpop.f32.mrf.mxu0
    %v418 = vadd.f32 %v398, %v417
    %419 = vdwg.mxu0
    %v420 = vxor.u32 %v418, 2147483648
    %v421 = vmul.f32 %v420, 1.442695
    %v422 = vpow.pop %v421
    %v423 = vadd.f32 %v422, 1.0
    %v424 = vrcp.pop %v423
    %v425 = vmul.f32 %v423, %v424
    %v426 = vsub.f32 1.0, %v425
    %v427 = vmul.f32 %v424, %v426
    %v428 = vadd.f32 %v424, %v427
    %vm429 = vweird.f32 %v423
    %vm430 = vweird.f32 %v424
    %vm431 = vmor %vm429, %vm430
    %v432 = vsel %vm431, %v424, %v428
    %v433 = vand.u32 2147483647, %v423
    %vm434 = vcmp.eq.f32.partialorder %v433, 8.507059e+37
    %v435 = vand.u32 %v423, 2147483648
    %v436 = vor.u32 1.1754944e-38, %v435
    %v437 = vsel %vm434, %v436, %v432
    %v438 = vmul.f32 1.0, %v437
    %v439 = vmul.f32 %v418, %v438
    %v440 = vld [vmem:[%s4] sm:$0xff]
    %v441 = vld [vmem:[%s4 + $0x8] sm:$0xff]
    %v442 = vld [vmem:[%s4 + $0x10] sm:$0xff]
    %v443 = vld [vmem:[%s4 + $0x18] sm:$0xff]
    %v444 = vld [vmem:[%s5] sm:$0x1]
    %v446 = vperm.slane %v444, 0
    %vm448 = vcmask 261120
    %v450 = vsel %vm448, %v439, 0
    %452 = vmatpush.msra.mxu0 0.0
    %453 = vmatpush.msra.mxu0 0.0
    %454 = vmatpush.msra.mxu0 0.0
    %455 = vmatpush.msra.mxu0 0.0
    %456 = vmatpush.msra.mxu0 0.0
    %457 = vmatpush.msra.mxu0 0.0
    %458 = vmatpush.msra.mxu0 0.0
    %459 = vmatpush.msra.mxu0 0.0
    %460 = vmatpush.msra.mxu0 0.0
    %461 = vmatpush.msra.mxu0 0.0
    %462 = vmatpush.msra.mxu0 0.0
    %463 = vmatpush.msra.mxu0 0.0
    %464 = vmatpush.msra.mxu0 %v443
    %465 = vmatpush.msra.mxu0 %v442
    %466 = vmatpush.msra.mxu0 %v441
    %467 = vmatpush.msra.mxu0 %v440
    %468 = vmatmul.f32.gmra.mxu0 %v450
    %v469 = vpop.f32.mrf.mxu0
    %v470 = vadd.f32 %v446, %v469
    %471 = vdwg.mxu0
    %472 = vst.msk [vmem:[#allocation2] sm:$0xff] %vm448, %v470
    // Predicated region
    $region26: #{tpu_custom_call.1} parent=1 // pred_check
      _
    $region27: #{tpu_custom_call.1} parent=1 // pred_check_branch
      %474 = sbr.rel (0) target = $region29
    $region28: #{tpu_custom_call.1} parent=1 // pred_region
      %476 = vsyncadd [#allocation3], 0
      %s478 = sshll.u32 [#allocation2], 4
      %s479 = int_to_ptr.vmem [resolvable:$true] %s478
      %s480 = sshll.u32 %s6, 4
      %s481 = int_to_ptr.hbm [resolvable:$true] %s480
      %483 = dma.vmem_to_hbm [thread:$0]  %s479, 128, %s481, [#allocation3]
    $region29: #{tpu_custom_call.1} parent=1 // pred_fallthru
      _
    // Predicated region
    $region30: #{tpu_custom_call.1} parent=1 // pred_check
      _
    $region31: #{tpu_custom_call.1} parent=1 // pred_check_branch
      %485 = sbr.rel (0) target = $region33
    $region32: #{tpu_custom_call.1} parent=1 // pred_region
      %487 = dma.done [#allocation3], 128
    $region33: #{tpu_custom_call.1} parent=1 // pred_fallthru
      _
    %488 = vsyncpa [#allocation3], 1

</llo_original>
